<compile_context>
chip_gen: v6e
topology: v6e:2x2x1
jax: 0.10.0
libtpu: 0.0.40
codegen_flags: <defaults>
</compile_context>

<pallas_src>
import jax
import jax.numpy as jnp
from jax.experimental import pallas as pl
from jax.experimental.pallas import tpu as pltpu


# --------------------------------------------------------------------------- #
# Pallas kernel: elementwise hard-swish on a lane-dense 2-D tile
# --------------------------------------------------------------------------- #
def _hswish_kernel(x_ref, o_ref):
    x = x_ref[...]
    three = jnp.asarray(3.0, x.dtype)
    six = jnp.asarray(6.0, x.dtype)
    inv6 = jnp.asarray(1.0 / 6.0, x.dtype)
    r6 = jnp.minimum(jnp.maximum(x + three, jnp.zeros_like(x)), six)  # relu6(x+3)
    o_ref[...] = x * r6 * inv6


# --------------------------------------------------------------------------- #
# Wrapper: flatten -> lane-dense (rows, LANES) slab -> kernel -> reshape back
# --------------------------------------------------------------------------- #
_MAX_LANES = 1024          # 8 vregs wide on the 128-lane minor dim
_TILE_ROWS = 512           # 512 x 1024 x 4B = 2 MiB per f32 tile


def _cdiv(a, b):
    return -(-a // b)


def _pick_lanes(total):
    # Prefer the widest lane count (multiple of 128) that divides `total`
    # exactly so no pad/slice HBM copies are needed around the kernel.
    for lanes in (1024, 512, 256, 128):
        if total % lanes == 0:
            return lanes
    # No exact fit: stay wide for big inputs, narrow for tiny ones.
    return 128 * max(1, min(_MAX_LANES // 128, total // (8 * 128)))


def hswish(x):
    """Hswish forward. Accepts any shape / float dtype; returns the same shape."""
    orig_shape = x.shape
    total = x.size
    if total == 0:
        return x

    lanes = _pick_lanes(total)
    rows = _cdiv(total, lanes)
    padded = rows * lanes

    flat = jnp.ravel(x)
    if padded != total:
        flat = jnp.pad(flat, (0, padded - total))      # hswish(0) == 0 -> benign
    x2d = flat.reshape(rows, lanes)

    # Single-tile case: block == full array, so no (8,128) alignment needed
    # on rows.  Multi-tile case: tile_rows=512 is sublane-aligned; a ragged
    # last block is masked by Pallas.
    tile_rows = min(rows, _TILE_ROWS)
    grid_rows = _cdiv(rows, tile_rows)

    out2d = pl.pallas_call(
        _hswish_kernel,
        out_shape=jax.ShapeDtypeStruct((rows, lanes), x.dtype),
        grid=(grid_rows,),
        in_specs=[pl.BlockSpec((tile_rows, lanes), lambda i: (i, 0))],
        out_specs=pl.BlockSpec((tile_rows, lanes), lambda i: (i, 0)),
        compiler_params=pltpu.CompilerParams(
            dimension_semantics=("parallel",)),
    )(x2d)

    out_flat = out2d.reshape(-1)
    if padded != total:
        out_flat = out_flat[:total]
    return out_flat.reshape(orig_shape)


# --------------------------------------------------------------------------- #
def _hswish_ref(x):
    return x * jnp.clip(x + 3.0, 0.0, 6.0) / 6.0


if __name__ == "__main__":
    # Shapes consistent with how Hswish is used inside the mobile blocks:
    # an NCHW activation tensor, batch=2, channels=4, spatial=16x16.
    N, C, H, W = 2, 4, 16, 16
    key = jax.random.PRNGKey(0)
    x = jax.random.normal(key, (N, C, H, W), jnp.float32) * 4.0

    fwd = jax.jit(hswish)
    out = fwd(x)
    out = jax.block_until_ready(out)

    assert out.shape == (N, C, H, W), out.shape
    assert bool(jnp.all(jnp.isfinite(out)))

    ref = _hswish_ref(x)
    assert bool(jnp.allclose(out, ref, atol=1e-6, rtol=1e-6)), "mismatch vs reference"

    # NOTE: the PyTorch `inplace=True` flag has no meaning under JAX's
    # functional semantics; the math is identical.
    print("KERNEL_OK")
</pallas_src>

<mosaic_0001>
module attributes {stable_mosaic.version = 11 : i64} {
  func.func @_hswish_kernel(%arg0: i32, %arg1: memref<2x1024xf32, #tpu.memory_space<vmem>>, %arg2: memref<2x1024xf32, #tpu.memory_space<vmem>>) attributes {dimension_semantics = [#tpu.dimension_semantics<parallel>], iteration_bounds = array<i64: 1>, scalar_prefetch = 0 : i64, scratch_operands = 0 : i64, tpu.core_type = #tpu.core_type<tc>, window_params = [{transform_indices = @transform_0, window_bounds = array<i64: 2, 1024>}, {transform_indices = @transform_1, window_bounds = array<i64: 2, 1024>}]} {
    %c0 = arith.constant 0 : index
    %c0_0 = arith.constant 0 : index
    %0 = vector.load %arg1[%c0, %c0_0] : memref<2x1024xf32, #tpu.memory_space<vmem>>, vector<2x1024xf32>
    %cst = arith.constant 3.000000e+00 : f32
    %1 = vector.broadcast %cst : f32 to vector<2x1024xf32>
    %2 = arith.addf %0, %1 : vector<2x1024xf32>
    %cst_1 = arith.constant 0.000000e+00 : f32
    %3 = vector.broadcast %cst_1 : f32 to vector<2x1024xf32>
    %4 = arith.maximumf %2, %3 : vector<2x1024xf32>
    %cst_2 = arith.constant 6.000000e+00 : f32
    %5 = vector.broadcast %cst_2 : f32 to vector<2x1024xf32>
    %6 = arith.minimumf %4, %5 : vector<2x1024xf32>
    %7 = arith.mulf %0, %6 : vector<2x1024xf32>
    %cst_3 = arith.constant 0.166666672 : f32
    %8 = vector.broadcast %cst_3 : f32 to vector<2x1024xf32>
    %9 = arith.mulf %7, %8 : vector<2x1024xf32>
    %c0_4 = arith.constant 0 : index
    %c0_5 = arith.constant 0 : index
    %10 = vector.load %arg2[%c0_4, %c0_5] : memref<2x1024xf32, #tpu.memory_space<vmem>>, vector<2x1024xf32>
    tpu.vector_store %arg2[%c0_4, %c0_5], %9 {strides = array<i32>} : memref<2x1024xf32, #tpu.memory_space<vmem>>, vector<2x1024xf32>,
    return
  }
  func.func @transform_0(%arg0: i32) -> (i32, i32) {
    %c0_i32 = arith.constant 0 : i32
    %c0_i32_0 = arith.constant 0 : i32
    return %arg0, %c0_i32 : i32, i32
  }
  func.func @transform_1(%arg0: i32) -> (i32, i32) {
    %c0_i32 = arith.constant 0 : i32
    %c0_i32_0 = arith.constant 0 : i32
    return %arg0, %c0_i32 : i32, i32
  }
}

</mosaic_0001>

<llo_original>
// kernel: hswish.1
$region0: #{hswish.1}
  #allocation0 [shape = 'u32[]', space=smem, size = 0x4, offset = 0x4, fixed_abs, tag = 'smem constant byte address 0x4 - core index']
  #allocation1 [shape = 'u32[144,128]{1,0:T(1,128)}', space=vmem, size = 0x12000, scoped, tag = 'internal scratch']
  %s0 = inlined_call_operand.vmem [shape: f32[2,1024], index: 0, kind: input, shape index: {}]
  %s1 = inlined_call_operand.vmem [shape: f32[2,1024], index: 1, kind: output, shape index: {}]
  %s2 = sld [smem:[#allocation0]]
  $region14: #{hswish.1} parent=0
    _
  %s4 = ssub.s32 1, %s2
  %s5 = scalar_select 0, %s4, %s2
  // Predicated region
  $region2: #{hswish.1} parent=0 // pred_check
    _
  $region3: #{hswish.1} parent=0 // pred_check_branch
    %7 = sbr.rel (0) target = $region5
  $region4: #{hswish.1} parent=0 // pred_region
    _
  $region5: #{hswish.1} parent=0 // pred_fallthru
    _
  %v8 = vld [vmem:[%s0] sm:$0xff]
  %v9 = vld [vmem:[%s0 + $0x8] sm:$0xff]
  %v10 = vadd.f32 %v8, 3.0
  %v11 = vadd.f32 %v9, 3.0
  %v12 = vmax.f32 %v10, 0.0
  %v13 = vmax.f32 %v11, 0.0
  %v14 = vmin.f32 %v12, 6.0
  %v15 = vmin.f32 %v13, 6.0
  %v16 = vmul.f32 %v8, %v14
  %v17 = vmul.f32 %v9, %v15
  %v18 = vmul.f32 %v16, 0.16666667
  %v19 = vmul.f32 %v17, 0.16666667
  %20 = vst [vmem:[%s1] sm:$0xff] %v18
  %21 = vst [vmem:[%s1 + $0x8] sm:$0xff] %v19
  // Predicated region
  $region6: #{hswish.1} parent=0 // pred_check
    _
  $region7: #{hswish.1} parent=0 // pred_check_branch
    %23 = sbr.rel (0) target = $region9
  $region8: #{hswish.1} parent=0 // pred_region
    _
  $region9: #{hswish.1} parent=0 // pred_fallthru
    _
  // Predicated region
  $region10: #{hswish.1} parent=0 // pred_check
    _
  $region11: #{hswish.1} parent=0 // pred_check_branch
    %25 = sbr.rel (0) target = $region13
  $region12: #{hswish.1} parent=0 // pred_region
    _
  $region13: #{hswish.1} parent=0 // pred_fallthru
    _

</llo_original>
